<compile_context>
chip_gen: v5e
topology: v5e:2x2
jax: 0.10.0
libtpu: 0.0.40
codegen_flags: <defaults>
</compile_context>

<pallas_src>
import jax
import jax.numpy as jnp
from jax.experimental import pallas as pl
from jax.experimental.pallas import tpu as pltpu


def _round_up(x, m):
    return ((x + m - 1) // m) * m


def _plan(dim, align, tile_max):
    """Pick (tile, padded_extent, n_blocks) minimizing padding waste."""
    padded = _round_up(dim, align)
    n_blocks = max(1, -(-padded // tile_max))
    tile = _round_up(-(-padded // n_blocks), align)
    return tile, tile * n_blocks, n_blocks


def _pad2(a, rows, cols):
    r, c = a.shape
    if (r, c) == (rows, cols):
        return a
    return jax.lax.pad(a, jnp.zeros((), a.dtype),
                       ((0, rows - r, 0), (0, cols - c, 0)))


# ---------------------------------------------------------------------------
# Single-block fast path (small shapes): whole arrays as one VMEM block.
# ---------------------------------------------------------------------------
def _single_block_kernel(x_ref, w_ref, b_ref, o_ref):
    v = jnp.dot(x_ref[...], w_ref[...], preferred_element_type=jnp.float32)
    v = v + b_ref[...] + x_ref[...].astype(jnp.float32)
    o_ref[...] = jnp.maximum(v, 0.0)


def _single_block_call(x1, w, b2):
    B, _ = x1.shape
    _, F_out = w.shape
    return pl.pallas_call(
        _single_block_kernel,
        out_shape=jax.ShapeDtypeStruct((B, F_out), jnp.float32),
    )(x1, w, b2)


# ---------------------------------------------------------------------------
# General (i, j, k)-tiled path with fused residual and direct o_ref accumulation.
# ---------------------------------------------------------------------------
def _tiled_kernel(x_ref, w_ref, b_ref, o_ref):
    j = pl.program_id(1)
    k = pl.program_id(2)

    prod = jnp.dot(x_ref[...], w_ref[...], preferred_element_type=jnp.float32)

    @pl.when(k == 0)
    def _():
        o_ref[...] = prod               # first partial product; no zero fill

    @pl.when(k != 0)
    def _():
        o_ref[...] += prod

    # Residual fusion: Kp == Np and tk == tn, so the x tile seen at k == j is
    # byte-identical to the (i, j) residual tile of x.
    @pl.when(k == j)
    def _():
        o_ref[...] += x_ref[...].astype(jnp.float32)

    @pl.when(k == pl.num_programs(2) - 1)
    def _():
        o_ref[...] = jnp.maximum(o_ref[...] + b_ref[...], 0.0)


def _tiled_call(x1, w_p, b_p, Np, tn, tm_max):
    B, F = x1.shape
    tm, Mp, n_i = _plan(B, 8, tm_max)
    tk, Kp = tn, Np                      # residual fusion requires these
    assert tn == tk and Kp == Np
    n_j = Np // tn
    n_k = Kp // tk

    x_p = _pad2(x1, Mp, Kp)              # pads only if not already aligned

    out_p = pl.pallas_call(
        _tiled_kernel,
        out_shape=jax.ShapeDtypeStruct((Mp, Np), jnp.float32),
        grid=(n_i, n_j, n_k),
        in_specs=[
            pl.BlockSpec((tm, tk), lambda i, j, k: (i, k)),   # x (matmul + residual)
            pl.BlockSpec((tk, tn), lambda i, j, k: (k, j)),   # W
            pl.BlockSpec((1, tn), lambda i, j, k: (0, j)),    # bias (finalize only)
        ],
        out_specs=pl.BlockSpec((tm, tn), lambda i, j, k: (i, j)),
        compiler_params=pltpu.CompilerParams(
            dimension_semantics=("parallel", "parallel", "arbitrary"),
        ),
        cost_estimate=pl.CostEstimate(
            flops=2 * Mp * Np * Kp,
            transcendentals=0,
            bytes_accessed=4 * (Mp * Kp + Kp * Np + Mp * Np + Np),
        ),
    )(x_p, w_p, b_p)

    return out_p[:B, :F]


# ---------------------------------------------------------------------------
# Model builder: pads parameters once, returns a jitted forward(x1, x2).
# ---------------------------------------------------------------------------
def make_model(w, b, *, tm_max=256, tn_max=512):
    """w: (F_in, F_out) (PyTorch weight already transposed), b: (F_out,)."""
    F_in, F_out = w.shape
    assert F_in == F_out, "residual add requires in_features == out_features"

    tn, Np, _ = _plan(F_out, 128, tn_max)
    # Pad parameters ONCE, outside the per-call hot path.
    w_p = _pad2(w, Np, Np)
    b_p = _pad2(b.reshape(1, F_out), 1, Np)
    b2 = b.reshape(1, F_out)

    def forward(x1, x2):
        del x2  # unused by the reference forward
        B, F = x1.shape
        assert F == F_in
        if B <= tm_max and F_out <= tn_max:
            # Whole problem fits one block: skip grid/pad/slice entirely.
            return _single_block_call(x1, w, b2)
        return _tiled_call(x1, w_p, b_p, Np, tn, tm_max)

    return jax.jit(forward)


if __name__ == "__main__":
    key = jax.random.PRNGKey(0)
    k_x1, k_x2, k_w, k_b = jax.random.split(key, 4)

    # --- shipped PyTorch shapes: batch=2, features=10 ---------------------
    B, F = 2, 10
    x1 = jax.random.normal(k_x1, (B, F), dtype=jnp.float32)
    x2 = jax.random.normal(k_x2, (B, F), dtype=jnp.float32)  # unused by forward

    # nn.Linear(10, 10)-style init: uniform(-1/sqrt(10), 1/sqrt(10)).
    bound = 1.0 / float(jnp.sqrt(jnp.float32(F)))
    w_torch = jax.random.uniform(k_w, (F, F), minval=-bound, maxval=bound,
                                 dtype=jnp.float32)               # (out, in)
    b = jax.random.uniform(k_b, (F,), minval=-bound, maxval=bound,
                           dtype=jnp.float32)
    # Make operands exactly bf16-representable so the check is insensitive to
    # MXU matmul pass count.
    x1 = x1.astype(jnp.bfloat16).astype(jnp.float32)
    w = w_torch.T.astype(jnp.bfloat16).astype(jnp.float32)        # (in, out)
    b = b.astype(jnp.bfloat16).astype(jnp.float32)

    model = make_model(w, b)
    out = jax.block_until_ready(model(x1, x2))

    ref = jnp.maximum(
        jnp.dot(x1, w, precision=jax.lax.Precision.HIGHEST) + b + x1, 0.0)
    assert out.shape == (B, F)
    assert jnp.allclose(out, ref, atol=1e-5, rtol=1e-5)

    # --- also exercise the general tiled path (awkward sizes) --------------
    B2, F2 = 300, 640
    xb = jax.random.normal(k_x2, (B2, F2), dtype=jnp.float32)
    wb = jax.random.uniform(k_w, (F2, F2), minval=-0.05, maxval=0.05,
                            dtype=jnp.float32)
    bb = jax.random.uniform(k_b, (F2,), minval=-0.05, maxval=0.05,
                            dtype=jnp.float32)
    xb = xb.astype(jnp.bfloat16).astype(jnp.float32)
    wb = wb.astype(jnp.bfloat16).astype(jnp.float32)
    bb = bb.astype(jnp.bfloat16).astype(jnp.float32)

    model2 = make_model(wb, bb)
    out2 = jax.block_until_ready(model2(xb, xb))
    ref2 = jnp.maximum(
        jnp.dot(xb, wb, precision=jax.lax.Precision.HIGHEST) + bb + xb, 0.0)
    assert out2.shape == (B2, F2)
    assert jnp.allclose(out2, ref2, atol=1e-3, rtol=1e-3)

    print("KERNEL_OK")
</pallas_src>

<mosaic_0001>
module attributes {stable_mosaic.version = 11 : i64} {
  func.func @_single_block_kernel(%arg0: memref<2x10xf32, #tpu.memory_space<vmem>>, %arg1: memref<10x10xf32, #tpu.memory_space<vmem>>, %arg2: memref<1x10xf32, #tpu.memory_space<vmem>>, %arg3: memref<2x10xf32, #tpu.memory_space<vmem>>) attributes {dimension_semantics = [], scalar_prefetch = 0 : i64, scratch_operands = 0 : i64, tpu.core_type = #tpu.core_type<tc>} {
    %c0 = arith.constant 0 : index
    %c0_0 = arith.constant 0 : index
    %0 = vector.load %arg0[%c0, %c0_0] : memref<2x10xf32, #tpu.memory_space<vmem>>, vector<2x10xf32>
    %c0_1 = arith.constant 0 : index
    %c0_2 = arith.constant 0 : index
    %1 = vector.load %arg1[%c0_1, %c0_2] : memref<10x10xf32, #tpu.memory_space<vmem>>, vector<10x10xf32>
    %cst = arith.constant dense<0.000000e+00> : vector<2x10xf32>
    %2 = tpu.matmul %0, %1, %cst {dimension_numbers = #tpu.dot_dimension_numbers<[1], [0], [0], [1], [0, 0, 1, 1], [], []>} : vector<2x10xf32>, vector<10x10xf32>, vector<2x10xf32> -> vector<2x10xf32>
    %c0_3 = arith.constant 0 : index
    %c0_4 = arith.constant 0 : index
    %3 = vector.load %arg2[%c0_3, %c0_4] : memref<1x10xf32, #tpu.memory_space<vmem>>, vector<1x10xf32>
    %4 = vector.broadcast %3 : vector<1x10xf32> to vector<2x10xf32>
    %5 = arith.addf %2, %4 : vector<2x10xf32>
    %c0_5 = arith.constant 0 : index
    %c0_6 = arith.constant 0 : index
    %6 = vector.load %arg0[%c0_5, %c0_6] : memref<2x10xf32, #tpu.memory_space<vmem>>, vector<2x10xf32>
    %7 = arith.addf %5, %6 : vector<2x10xf32>
    %cst_7 = arith.constant 0.000000e+00 : f32
    %8 = vector.broadcast %cst_7 : f32 to vector<2x10xf32>
    %9 = arith.maximumf %7, %8 : vector<2x10xf32>
    %c0_8 = arith.constant 0 : index
    %c0_9 = arith.constant 0 : index
    %10 = vector.load %arg3[%c0_8, %c0_9] : memref<2x10xf32, #tpu.memory_space<vmem>>, vector<2x10xf32>
    tpu.vector_store %arg3[%c0_8, %c0_9], %9 {strides = array<i32>} : memref<2x10xf32, #tpu.memory_space<vmem>>, vector<2x10xf32>,
    return
  }
}

</mosaic_0001>

<llo_original>
// kernel: forward.1
$region0: #{forward.1}
  #allocation0 [shape = 'u32[]', space=smem, size = 0x4, offset = 0x4, fixed_abs, tag = 'smem constant byte address 0x4 - core index']
  #allocation1 [shape = 'u32[72,128]{1,0:T(1,128)}', space=vmem, size = 0x9000, scoped, tag = 'internal scratch']
  %s0 = inlined_call_operand.hbm [shape: f32[2,10], index: 0, kind: input, shape index: {}]
  %s1 = inlined_call_operand.hbm [shape: f32[10,10], index: 1, kind: input, shape index: {}]
  %s2 = inlined_call_operand.vmem [shape: f32[1,10], index: 2, kind: input, shape index: {}]
  %s3 = inlined_call_operand.hbm [shape: f32[2,10], index: 3, kind: output, shape index: {}]
  %s4 = sld [smem:[#allocation0]]
  $region30: #{forward.1} parent=0
    _
  %s6 = ssub.s32 1, %s4
  %s7 = scalar_select 0, %s6, %s4
  $region1: #{forward.1} parent=0
    #allocation2 [shape = 'u8[1024]{0}', space=vmem, size = 0x400, scoped, tag = 'input window, operand 0, single buffered']
    #allocation3 [shape = 's32[1]{0}', space=sflag, size = 0x4, scoped, tag = 'scoped memory for forward.1']
    #allocation4 [shape = 's32[1]{0}', space=sflag, size = 0x4, scoped, tag = 'scoped memory for forward.1']
    #allocation5 [shape = 'u8[8192]{0}', space=vmem, size = 0x2000, scoped, tag = 'input window, operand 1, single buffered']
    #allocation6 [shape = 's32[1]{0}', space=sflag, size = 0x4, scoped, tag = 'scoped memory for forward.1']
    #allocation7 [shape = 'u8[1024]{0}', space=vmem, size = 0x400, scoped, tag = 'output window, operand 0, single buffered']
    %8 = vsyncpa [#allocation3], 0
    %9 = vsyncpa [#allocation6], 0
    %10 = vsyncpa [#allocation4], 0
    // Predicated region
    $region2: #{forward.1} parent=1 // pred_check
      _
    $region3: #{forward.1} parent=1 // pred_check_branch
      %12 = sbr.rel (0) target = $region5
    $region4: #{forward.1} parent=1 // pred_region
      %14 = vsyncadd [#allocation3], 0
      %s16 = sshll.u32 %s0, 4
      %s17 = int_to_ptr.hbm [resolvable:$true] %s16
      %s18 = sshll.u32 [#allocation2], 4
      %s19 = int_to_ptr.vmem [resolvable:$true] %s18
      %21 = dma.hbm_to_vmem [thread:$0]  %s17, 32, %s19, [#allocation3]
    $region5: #{forward.1} parent=1 // pred_fallthru
      _
    // Predicated region
    $region6: #{forward.1} parent=1 // pred_check
      _
    $region7: #{forward.1} parent=1 // pred_check_branch
      %23 = sbr.rel (0) target = $region9
    $region8: #{forward.1} parent=1 // pred_region
      %25 = vsyncadd [#allocation6], 0
      %s26 = sshll.u32 %s1, 4
      %s27 = int_to_ptr.hbm [resolvable:$true] %s26
      %s28 = sshll.u32 [#allocation5], 4
      %s29 = int_to_ptr.vmem [resolvable:$true] %s28
      %34 = dma.hbm_to_vmem [thread:$0]  %s27, 256, %s29, [#allocation6], 128, 128, 8
    $region9: #{forward.1} parent=1 // pred_fallthru
      _
    // Predicated region
    $region10: #{forward.1} parent=1 // pred_check
      _
    $region11: #{forward.1} parent=1 // pred_check_branch
      %36 = sbr.rel (0) target = $region13
    $region12: #{forward.1} parent=1 // pred_region
      _
    $region13: #{forward.1} parent=1 // pred_fallthru
      _
    // Predicated region
    $region14: #{forward.1} parent=1 // pred_check
      _
    $region15: #{forward.1} parent=1 // pred_check_branch
      %38 = sbr.rel (0) target = $region17
    $region16: #{forward.1} parent=1 // pred_region
      %40 = dma.done [#allocation3], 32
    $region17: #{forward.1} parent=1 // pred_fallthru
      _
    // Predicated region
    $region18: #{forward.1} parent=1 // pred_check
      _
    $region19: #{forward.1} parent=1 // pred_check_branch
      %42 = sbr.rel (0) target = $region21
    $region20: #{forward.1} parent=1 // pred_region
      %44 = dma.done [#allocation6], 256
    $region21: #{forward.1} parent=1 // pred_fallthru
      _
    %v45 = vld [vmem:[#allocation2] sm:$0x3]
    %v46 = vld [vmem:[#allocation5] sm:$0xff]
    %v47 = vld [vmem:[#allocation5 + $0x8] sm:$0x3]
    %v48 = vld [vmem:[%s2] sm:$0x1]
    %v50 = vperm.slane %v48, 0
    %vm52 = vcmask 80896
    %v54 = vsel %vm52, %v45, 0
    %vm56 = vcmask 1041408
    %v58 = vsel %vm56, %v47, 0
    %60 = vmatpush.msra.mxu0 0.0
    %61 = vmatpush.msra.mxu0 0.0
    %62 = vmatpush.msra.mxu0 0.0
    %63 = vmatpush.msra.mxu0 0.0
    %64 = vmatpush.msra.mxu0 0.0
    %65 = vmatpush.msra.mxu0 0.0
    %66 = vmatpush.msra.mxu0 0.0
    %67 = vmatpush.msra.mxu0 0.0
    %68 = vmatpush.msra.mxu0 0.0
    %69 = vmatpush.msra.mxu0 0.0
    %70 = vmatpush.msra.mxu0 0.0
    %71 = vmatpush.msra.mxu0 0.0
    %72 = vmatpush.msra.mxu0 0.0
    %73 = vmatpush.msra.mxu0 0.0
    %74 = vmatpush.msra.mxu0 %v58
    %75 = vmatpush.msra.mxu0 %v46
    %76 = vmatmul.f32.gmra.mxu0 %v54
    %v77 = vpop.f32.mrf.mxu0
    %v78 = vadd.f32 %v50, %v77
    %79 = vdwg.mxu0
    %v80 = vadd.f32 %v78, %v45
    %v81 = vmax.f32 %v80, 0.0
    %vm82 = vcmask 74752
    %83 = vst.msk [vmem:[#allocation7] sm:$0x3] %vm82, %v81
    // Predicated region
    $region22: #{forward.1} parent=1 // pred_check
      _
    $region23: #{forward.1} parent=1 // pred_check_branch
      %85 = sbr.rel (0) target = $region25
    $region24: #{forward.1} parent=1 // pred_region
      %87 = vsyncadd [#allocation4], 0
      %s89 = sshll.u32 [#allocation7], 4
      %s90 = int_to_ptr.vmem [resolvable:$true] %s89
      %s91 = sshll.u32 %s3, 4
      %s92 = int_to_ptr.hbm [resolvable:$true] %s91
      %94 = dma.vmem_to_hbm [thread:$0]  %s90, 32, %s92, [#allocation4]
    $region25: #{forward.1} parent=1 // pred_fallthru
      _
    // Predicated region
    $region26: #{forward.1} parent=1 // pred_check
      _
    $region27: #{forward.1} parent=1 // pred_check_branch
      %96 = sbr.rel (0) target = $region29
    $region28: #{forward.1} parent=1 // pred_region
      %98 = dma.done [#allocation4], 32
    $region29: #{forward.1} parent=1 // pred_fallthru
      _
    %99 = vsyncpa [#allocation3], 1
    %100 = vsyncpa [#allocation6], 1
    %101 = vsyncpa [#allocation4], 1

</llo_original>
